<compile_context>
chip_gen: v5e
topology: v5e:2x2
jax: 0.10.0
libtpu: 0.0.40
codegen_flags: <defaults>
</compile_context>

<pallas_src>
import functools

import jax
import jax.numpy as jnp
from jax.experimental import pallas as pl
from jax.experimental.pallas import tpu as pltpu


def _round_up(x, m):
    return (x + m - 1) // m * m


def _char_decoder_kernel(x_ref, h0_ref, c0_ref, wih_t_ref, whh_t_ref, b_ref,
                         wout_t_ref, bout_ref,
                         scores_ref, hout_ref, cout_ref,
                         gx_all, h_all, *, length, batch_p, hidden):
    B = batch_p          # padded batch (multiple of 8 sublanes)
    H = hidden

    # (1) Hoisted input projection + bias: ONE (L*Bp, E) x (E, 4H) MXU pass instead of
    #     L tiny matmuls + bias broadcasts on the sequential critical path.
    gx_all[...] = (jnp.dot(x_ref[...], wih_t_ref[...],
                           preferred_element_type=jnp.float32)
                   + b_ref[...])

    whh_t = whh_t_ref[...]          # (H, 4H), loaded once, reused every step

    def step(t, carry):
        h, c = carry
        off = pl.multiple_of(t * B, B)                       # Bp is a multiple of 8 -> aligned
        gates = gx_all[pl.ds(off, B), :] + jnp.dot(
            h, whh_t, preferred_element_type=jnp.float32)    # (Bp, 4H), PyTorch order [i,f,g,o]
        i_g = jax.nn.sigmoid(gates[:, 0 * H:1 * H])
        f_g = jax.nn.sigmoid(gates[:, 1 * H:2 * H])
        g_g = jnp.tanh(gates[:, 2 * H:3 * H])
        o_g = jax.nn.sigmoid(gates[:, 3 * H:4 * H])
        c_new = f_g * c + i_g * g_g
        h_new = o_g * jnp.tanh(c_new)
        h_all[pl.ds(off, B), :] = h_new                      # stash h_t for the batched projection
        return (h_new, c_new)

    h_fin, c_fin = jax.lax.fori_loop(
        0, length, step, (h0_ref[...], c0_ref[...]), unroll=True)

    hout_ref[...] = h_fin.astype(hout_ref.dtype)
    cout_ref[...] = c_fin.astype(cout_ref.dtype)

    # (2) Hoisted vocab projection: ONE (L*Bp, H) x (H, Vp) matmul writing a lane-dense
    #     (Vp multiple of 128) output slab in a single unmasked store.
    scores_ref[...] = (jnp.dot(h_all[...], wout_t_ref[...],
                               preferred_element_type=jnp.float32)
                       + bout_ref[...]).astype(scores_ref.dtype)


def char_decoder_forward(input_tokens, dec_hidden, params):
    """Pallas implementation of CharDecoder.forward.

    input_tokens: (length, batch) int32
    dec_hidden:   tuple of (1, batch, hidden) float32, or None
    returns: scores (length, batch, vocab), (h, c) each (1, batch, hidden)
    """
    emb = params["embedding"]            # (V, E), pad row zeroed
    w_ih = params["w_ih"]                # (4H, E)
    w_hh = params["w_hh"]                # (4H, H)
    b_ih = params["b_ih"]                # (4H,)
    b_hh = params["b_hh"]                # (4H,)
    w_out = params["w_out"]              # (V, H)
    b_out = params["b_out"]              # (V,)

    L, B = input_tokens.shape
    V, E = emb.shape
    H = w_hh.shape[1]

    Bp = max(_round_up(B, 8), 8)         # sublane-aligned batch
    Vp = _round_up(V, 128)               # lane-dense vocab for the scores store

    if dec_hidden is None:
        h0 = jnp.zeros((B, H), jnp.float32)
        c0 = jnp.zeros((B, H), jnp.float32)
    else:
        h0 = dec_hidden[0].reshape(B, H).astype(jnp.float32)
        c0 = dec_hidden[1].reshape(B, H).astype(jnp.float32)

    # Embedding gather stays in plain JAX (tiny at these sizes).
    # TODO(synk): at large L*B*E move the gather in-kernel via scalar-prefetched token ids.
    x = emb[input_tokens].astype(jnp.float32)                    # (L, B, E)

    # Pad batch to Bp sublanes; flatten (L, Bp) -> L*Bp rows for the big matmuls.
    x_p = jnp.zeros((L, Bp, E), jnp.float32).at[:, :B, :].set(x).reshape(L * Bp, E)
    h0_p = jnp.zeros((Bp, H), jnp.float32).at[:B].set(h0)
    c0_p = jnp.zeros((Bp, H), jnp.float32).at[:B].set(c0)

    wih_t = w_ih.T.astype(jnp.float32)                           # (E, 4H)
    whh_t = w_hh.T.astype(jnp.float32)                           # (H, 4H)
    b = (b_ih + b_hh).astype(jnp.float32).reshape(1, 4 * H)      # (1, 4H)
    wout_t = jnp.zeros((H, Vp), jnp.float32).at[:, :V].set(w_out.T.astype(jnp.float32))
    bout = jnp.zeros((1, Vp), jnp.float32).at[:, :V].set(b_out.astype(jnp.float32).reshape(1, V))

    kernel = functools.partial(_char_decoder_kernel, length=L, batch_p=Bp, hidden=H)

    def vmem_spec():
        return pl.BlockSpec(memory_space=pltpu.MemorySpace.VMEM)

    scores_p, h_fin, c_fin = pl.pallas_call(
        kernel,
        out_shape=(
            jax.ShapeDtypeStruct((L * Bp, Vp), jnp.float32),     # padded scores slab
            jax.ShapeDtypeStruct((Bp, H), jnp.float32),          # final h
            jax.ShapeDtypeStruct((Bp, H), jnp.float32),          # final c
        ),
        in_specs=[vmem_spec() for _ in range(8)],
        out_specs=(vmem_spec(), vmem_spec(), vmem_spec()),
        scratch_shapes=[
            pltpu.VMEM((L * Bp, 4 * H), jnp.float32),            # hoisted input-proj gates
            pltpu.VMEM((L * Bp, H), jnp.float32),                # all hidden states h_t
        ],
    )(x_p, h0_p, c0_p, wih_t, whh_t, b, wout_t, bout)

    scores = scores_p.reshape(L, Bp, Vp)[:, :B, :V]
    h_out = h_fin[:B].reshape(1, B, H)
    c_out = c_fin[:B].reshape(1, B, H)
    return scores, (h_out, c_out)


def _reference_forward(input_tokens, dec_hidden, params):
    """Pure-JAX reference (lax.scan) with identical semantics, for verification."""
    emb = params["embedding"]
    w_ih, w_hh = params["w_ih"], params["w_hh"]
    b_ih, b_hh = params["b_ih"], params["b_hh"]
    w_out, b_out = params["w_out"], params["b_out"]
    H = w_hh.shape[1]
    L, B = input_tokens.shape

    x_t = emb[input_tokens]
    if dec_hidden is None:
        h0 = jnp.zeros((B, H), jnp.float32)
        c0 = jnp.zeros((B, H), jnp.float32)
    else:
        h0 = dec_hidden[0].reshape(B, H)
        c0 = dec_hidden[1].reshape(B, H)

    def step(carry, x):
        h, c = carry
        gates = x @ w_ih.T + h @ w_hh.T + b_ih + b_hh
        i = jax.nn.sigmoid(gates[:, 0 * H:1 * H])
        f = jax.nn.sigmoid(gates[:, 1 * H:2 * H])
        g = jnp.tanh(gates[:, 2 * H:3 * H])
        o = jax.nn.sigmoid(gates[:, 3 * H:4 * H])
        c_new = f * c + i * g
        h_new = o * jnp.tanh(c_new)
        return (h_new, c_new), h_new @ w_out.T + b_out

    (h_f, c_f), scores = jax.lax.scan(step, (h0, c0), x_t)
    return scores, (h_f[None], c_f[None])


def init_params(key, vocab_size, char_embedding_size, hidden_size, pad_idx):
    ks = jax.random.split(key, 7)
    scale = 0.1
    embedding = scale * jax.random.normal(ks[0], (vocab_size, char_embedding_size), jnp.float32)
    embedding = embedding.at[pad_idx].set(0.0)  # padding_idx row is zero
    return {
        "embedding": embedding,
        "w_ih": scale * jax.random.normal(ks[1], (4 * hidden_size, char_embedding_size), jnp.float32),
        "w_hh": scale * jax.random.normal(ks[2], (4 * hidden_size, hidden_size), jnp.float32),
        "b_ih": scale * jax.random.normal(ks[3], (4 * hidden_size,), jnp.float32),
        "b_hh": scale * jax.random.normal(ks[4], (4 * hidden_size,), jnp.float32),
        "w_out": scale * jax.random.normal(ks[5], (vocab_size, hidden_size), jnp.float32),
        "b_out": scale * jax.random.normal(ks[6], (vocab_size,), jnp.float32),
    }


if __name__ == "__main__":
    LENGTH = 8
    BATCH = 4
    HIDDEN = 32
    CHAR_EMB = 32
    VOCAB = 64
    PAD_IDX = 0

    key = jax.random.PRNGKey(0)
    k_param, k_tok, k_h, k_c = jax.random.split(key, 4)

    params = init_params(k_param, VOCAB, CHAR_EMB, HIDDEN, PAD_IDX)
    input_tokens = jax.random.randint(k_tok, (LENGTH, BATCH), 0, VOCAB, dtype=jnp.int32)
    dec_hidden = (
        0.1 * jax.random.normal(k_h, (1, BATCH, HIDDEN), jnp.float32),
        0.1 * jax.random.normal(k_c, (1, BATCH, HIDDEN), jnp.float32),
    )

    scores, (h_out, c_out) = char_decoder_forward(input_tokens, dec_hidden, params)
    jax.block_until_ready((scores, h_out, c_out))

    # Correctness check against a pure-JAX reference (all-f32 math -> tight tolerance).
    ref_scores, (ref_h, ref_c) = _reference_forward(input_tokens, dec_hidden, params)
    assert scores.shape == (LENGTH, BATCH, VOCAB)
    assert h_out.shape == (1, BATCH, HIDDEN) and c_out.shape == (1, BATCH, HIDDEN)
    assert jnp.allclose(scores, ref_scores, atol=1e-4, rtol=1e-4)
    assert jnp.allclose(h_out, ref_h, atol=1e-4, rtol=1e-4)
    assert jnp.allclose(c_out, ref_c, atol=1e-4, rtol=1e-4)

    print("KERNEL_OK")
</pallas_src>

<mosaic_0001>
module attributes {stable_mosaic.version = 11 : i64} {
  func.func @_char_decoder_kernel(%arg0: memref<64x32xf32, #tpu.memory_space<vmem>>, %arg1: memref<8x32xf32, #tpu.memory_space<vmem>>, %arg2: memref<8x32xf32, #tpu.memory_space<vmem>>, %arg3: memref<32x128xf32, #tpu.memory_space<vmem>>, %arg4: memref<32x128xf32, #tpu.memory_space<vmem>>, %arg5: memref<1x128xf32, #tpu.memory_space<vmem>>, %arg6: memref<32x128xf32, #tpu.memory_space<vmem>>, %arg7: memref<1x128xf32, #tpu.memory_space<vmem>>, %arg8: memref<64x128xf32, #tpu.memory_space<vmem>>, %arg9: memref<8x32xf32, #tpu.memory_space<vmem>>, %arg10: memref<8x32xf32, #tpu.memory_space<vmem>>, %arg11: memref<64x128xf32, #tpu.memory_space<vmem>>, %arg12: memref<64x32xf32, #tpu.memory_space<vmem>>) attributes {dimension_semantics = [], scalar_prefetch = 0 : i64, scratch_operands = 2 : i64, tpu.core_type = #tpu.core_type<tc>} {
    %c0 = arith.constant 0 : index
    %c0_0 = arith.constant 0 : index
    %0 = vector.load %arg0[%c0, %c0_0] : memref<64x32xf32, #tpu.memory_space<vmem>>, vector<64x32xf32>
    %c0_1 = arith.constant 0 : index
    %c0_2 = arith.constant 0 : index
    %1 = vector.load %arg3[%c0_1, %c0_2] : memref<32x128xf32, #tpu.memory_space<vmem>>, vector<32x128xf32>
    %cst = arith.constant dense<0.000000e+00> : vector<64x128xf32>
    %2 = tpu.matmul %0, %1, %cst {dimension_numbers = #tpu.dot_dimension_numbers<[1], [0], [0], [1], [0, 0, 1, 1], [], []>} : vector<64x32xf32>, vector<32x128xf32>, vector<64x128xf32> -> vector<64x128xf32>
    %c0_3 = arith.constant 0 : index
    %c0_4 = arith.constant 0 : index
    %3 = vector.load %arg5[%c0_3, %c0_4] : memref<1x128xf32, #tpu.memory_space<vmem>>, vector<1x128xf32>
    %4 = vector.broadcast %3 : vector<1x128xf32> to vector<64x128xf32>
    %5 = arith.addf %2, %4 : vector<64x128xf32>
    %c0_5 = arith.constant 0 : index
    %c0_6 = arith.constant 0 : index
    %6 = vector.load %arg11[%c0_5, %c0_6] : memref<64x128xf32, #tpu.memory_space<vmem>>, vector<64x128xf32>
    tpu.vector_store %arg11[%c0_5, %c0_6], %5 {strides = array<i32>} : memref<64x128xf32, #tpu.memory_space<vmem>>, vector<64x128xf32>,
    %c0_7 = arith.constant 0 : index
    %c0_8 = arith.constant 0 : index
    %7 = vector.load %arg4[%c0_7, %c0_8] : memref<32x128xf32, #tpu.memory_space<vmem>>, vector<32x128xf32>
    %c0_9 = arith.constant 0 : index
    %c0_10 = arith.constant 0 : index
    %8 = vector.load %arg1[%c0_9, %c0_10] : memref<8x32xf32, #tpu.memory_space<vmem>>, vector<8x32xf32>
    %c0_11 = arith.constant 0 : index
    %c0_12 = arith.constant 0 : index
    %9 = vector.load %arg2[%c0_11, %c0_12] : memref<8x32xf32, #tpu.memory_space<vmem>>, vector<8x32xf32>
    %c0_i32 = arith.constant 0 : i32
    %c8_i32 = arith.constant 8 : i32
    %10 = arith.muli %c0_i32, %c8_i32 : i32
    %11 = tpu.assume_multiple %10, 8 : i32
    %12 = arith.index_cast %11 : i32 to index
    %c0_13 = arith.constant 0 : index
    %13 = vector.load %arg11[%12, %c0_13] : memref<64x128xf32, #tpu.memory_space<vmem>>, vector<8x128xf32>
    %cst_14 = arith.constant dense<0.000000e+00> : vector<8x128xf32>
    %14 = tpu.matmul %8, %7, %cst_14 {dimension_numbers = #tpu.dot_dimension_numbers<[1], [0], [0], [1], [0, 0, 1, 1], [], []>} : vector<8x32xf32>, vector<32x128xf32>, vector<8x128xf32> -> vector<8x128xf32>
    %15 = arith.addf %13, %14 : vector<8x128xf32>
    %16 = vector.extract_strided_slice %15 {offsets = [0, 0], sizes = [8, 32], strides = [1, 1]} : vector<8x128xf32> to vector<8x32xf32>
    %17 = arith.negf %16 : vector<8x32xf32>
    %18 = math.exp %17 : vector<8x32xf32>
    %cst_15 = arith.constant 1.000000e+00 : f32
    %19 = vector.broadcast %cst_15 : f32 to vector<8x32xf32>
    %20 = arith.addf %19, %18 : vector<8x32xf32>
    %21 = arith.divf %19, %20 : vector<8x32xf32>
    %22 = vector.extract_strided_slice %15 {offsets = [0, 32], sizes = [8, 32], strides = [1, 1]} : vector<8x128xf32> to vector<8x32xf32>
    %23 = arith.negf %22 : vector<8x32xf32>
    %24 = math.exp %23 : vector<8x32xf32>
    %cst_16 = arith.constant 1.000000e+00 : f32
    %25 = vector.broadcast %cst_16 : f32 to vector<8x32xf32>
    %26 = arith.addf %25, %24 : vector<8x32xf32>
    %27 = arith.divf %25, %26 : vector<8x32xf32>
    %28 = vector.extract_strided_slice %15 {offsets = [0, 64], sizes = [8, 32], strides = [1, 1]} : vector<8x128xf32> to vector<8x32xf32>
    %29 = math.tanh %28 : vector<8x32xf32>
    %30 = vector.extract_strided_slice %15 {offsets = [0, 96], sizes = [8, 32], strides = [1, 1]} : vector<8x128xf32> to vector<8x32xf32>
    %31 = arith.negf %30 : vector<8x32xf32>
    %32 = math.exp %31 : vector<8x32xf32>
    %cst_17 = arith.constant 1.000000e+00 : f32
    %33 = vector.broadcast %cst_17 : f32 to vector<8x32xf32>
    %34 = arith.addf %33, %32 : vector<8x32xf32>
    %35 = arith.divf %33, %34 : vector<8x32xf32>
    %36 = arith.mulf %27, %9 : vector<8x32xf32>
    %37 = arith.mulf %21, %29 : vector<8x32xf32>
    %38 = arith.addf %36, %37 : vector<8x32xf32>
    %39 = math.tanh %38 : vector<8x32xf32>
    %40 = arith.mulf %35, %39 : vector<8x32xf32>
    %41 = arith.index_cast %11 : i32 to index
    %c0_18 = arith.constant 0 : index
    %42 = vector.load %arg12[%41, %c0_18] : memref<64x32xf32, #tpu.memory_space<vmem>>, vector<8x32xf32>
    tpu.vector_store %arg12[%41, %c0_18], %40 {strides = array<i32>} : memref<64x32xf32, #tpu.memory_space<vmem>>, vector<8x32xf32>,
    %c1_i32 = arith.constant 1 : i32
    %c8_i32_19 = arith.constant 8 : i32
    %43 = arith.muli %c1_i32, %c8_i32_19 : i32
    %44 = tpu.assume_multiple %43, 8 : i32
    %45 = arith.index_cast %44 : i32 to index
    %c0_20 = arith.constant 0 : index
    %46 = vector.load %arg11[%45, %c0_20] : memref<64x128xf32, #tpu.memory_space<vmem>>, vector<8x128xf32>
    %cst_21 = arith.constant dense<0.000000e+00> : vector<8x128xf32>
    %47 = tpu.matmul %40, %7, %cst_21 {dimension_numbers = #tpu.dot_dimension_numbers<[1], [0], [0], [1], [0, 0, 1, 1], [], []>} : vector<8x32xf32>, vector<32x128xf32>, vector<8x128xf32> -> vector<8x128xf32>
    %48 = arith.addf %46, %47 : vector<8x128xf32>
    %49 = vector.extract_strided_slice %48 {offsets = [0, 0], sizes = [8, 32], strides = [1, 1]} : vector<8x128xf32> to vector<8x32xf32>
    %50 = arith.negf %49 : vector<8x32xf32>
    %51 = math.exp %50 : vector<8x32xf32>
    %cst_22 = arith.constant 1.000000e+00 : f32
    %52 = vector.broadcast %cst_22 : f32 to vector<8x32xf32>
    %53 = arith.addf %52, %51 : vector<8x32xf32>
    %54 = arith.divf %52, %53 : vector<8x32xf32>
    %55 = vector.extract_strided_slice %48 {offsets = [0, 32], sizes = [8, 32], strides = [1, 1]} : vector<8x128xf32> to vector<8x32xf32>
    %56 = arith.negf %55 : vector<8x32xf32>
    %57 = math.exp %56 : vector<8x32xf32>
    %cst_23 = arith.constant 1.000000e+00 : f32
    %58 = vector.broadcast %cst_23 : f32 to vector<8x32xf32>
    %59 = arith.addf %58, %57 : vector<8x32xf32>
    %60 = arith.divf %58, %59 : vector<8x32xf32>
    %61 = vector.extract_strided_slice %48 {offsets = [0, 64], sizes = [8, 32], strides = [1, 1]} : vector<8x128xf32> to vector<8x32xf32>
    %62 = math.tanh %61 : vector<8x32xf32>
    %63 = vector.extract_strided_slice %48 {offsets = [0, 96], sizes = [8, 32], strides = [1, 1]} : vector<8x128xf32> to vector<8x32xf32>
    %64 = arith.negf %63 : vector<8x32xf32>
    %65 = math.exp %64 : vector<8x32xf32>
    %cst_24 = arith.constant 1.000000e+00 : f32
    %66 = vector.broadcast %cst_24 : f32 to vector<8x32xf32>
    %67 = arith.addf %66, %65 : vector<8x32xf32>
    %68 = arith.divf %66, %67 : vector<8x32xf32>
    %69 = arith.mulf %60, %38 : vector<8x32xf32>
    %70 = arith.mulf %54, %62 : vector<8x32xf32>
    %71 = arith.addf %69, %70 : vector<8x32xf32>
    %72 = math.tanh %71 : vector<8x32xf32>
    %73 = arith.mulf %68, %72 : vector<8x32xf32>
    %74 = arith.index_cast %44 : i32 to index
    %c0_25 = arith.constant 0 : index
    %75 = vector.load %arg12[%74, %c0_25] : memref<64x32xf32, #tpu.memory_space<vmem>>, vector<8x32xf32>
    tpu.vector_store %arg12[%74, %c0_25], %73 {strides = array<i32>} : memref<64x32xf32, #tpu.memory_space<vmem>>, vector<8x32xf32>,
    %c2_i32 = arith.constant 2 : i32
    %c8_i32_26 = arith.constant 8 : i32
    %76 = arith.muli %c2_i32, %c8_i32_26 : i32
    %77 = tpu.assume_multiple %76, 8 : i32
    %78 = arith.index_cast %77 : i32 to index
    %c0_27 = arith.constant 0 : index
    %79 = vector.load %arg11[%78, %c0_27] : memref<64x128xf32, #tpu.memory_space<vmem>>, vector<8x128xf32>
    %cst_28 = arith.constant dense<0.000000e+00> : vector<8x128xf32>
    %80 = tpu.matmul %73, %7, %cst_28 {dimension_numbers = #tpu.dot_dimension_numbers<[1], [0], [0], [1], [0, 0, 1, 1], [], []>} : vector<8x32xf32>, vector<32x128xf32>, vector<8x128xf32> -> vector<8x128xf32>
    %81 = arith.addf %79, %80 : vector<8x128xf32>
    %82 = vector.extract_strided_slice %81 {offsets = [0, 0], sizes = [8, 32], strides = [1, 1]} : vector<8x128xf32> to vector<8x32xf32>
    %83 = arith.negf %82 : vector<8x32xf32>
    %84 = math.exp %83 : vector<8x32xf32>
    %cst_29 = arith.constant 1.000000e+00 : f32
    %85 = vector.broadcast %cst_29 : f32 to vector<8x32xf32>
    %86 = arith.addf %85, %84 : vector<8x32xf32>
    %87 = arith.divf %85, %86 : vector<8x32xf32>
    %88 = vector.extract_strided_slice %81 {offsets = [0, 32], sizes = [8, 32], strides = [1, 1]} : vector<8x128xf32> to vector<8x32xf32>
    %89 = arith.negf %88 : vector<8x32xf32>
    %90 = math.exp %89 : vector<8x32xf32>
    %cst_30 = arith.constant 1.000000e+00 : f32
    %91 = vector.broadcast %cst_30 : f32 to vector<8x32xf32>
    %92 = arith.addf %91, %90 : vector<8x32xf32>
    %93 = arith.divf %91, %92 : vector<8x32xf32>
    %94 = vector.extract_strided_slice %81 {offsets = [0, 64], sizes = [8, 32], strides = [1, 1]} : vector<8x128xf32> to vector<8x32xf32>
    %95 = math.tanh %94 : vector<8x32xf32>
    %96 = vector.extract_strided_slice %81 {offsets = [0, 96], sizes = [8, 32], strides = [1, 1]} : vector<8x128xf32> to vector<8x32xf32>
    %97 = arith.negf %96 : vector<8x32xf32>
    %98 = math.exp %97 : vector<8x32xf32>
    %cst_31 = arith.constant 1.000000e+00 : f32
    %99 = vector.broadcast %cst_31 : f32 to vector<8x32xf32>
    %100 = arith.addf %99, %98 : vector<8x32xf32>
    %101 = arith.divf %99, %100 : vector<8x32xf32>
    %102 = arith.mulf %93, %71 : vector<8x32xf32>
    %103 = arith.mulf %87, %95 : vector<8x32xf32>
    %104 = arith.addf %102, %103 : vector<8x32xf32>
    %105 = math.tanh %104 : vector<8x32xf32>
    %106 = arith.mulf %101, %105 : vector<8x32xf32>
    %107 = arith.index_cast %77 : i32 to index
    %c0_32 = arith.constant 0 : index
    %108 = vector.load %arg12[%107, %c0_32] : memref<64x32xf32, #tpu.memory_space<vmem>>, vector<8x32xf32>
    tpu.vector_store %arg12[%107, %c0_32], %106 {strides = array<i32>} : memref<64x32xf32, #tpu.memory_space<vmem>>, vector<8x32xf32>,
    %c3_i32 = arith.constant 3 : i32
    %c8_i32_33 = arith.constant 8 : i32
    %109 = arith.muli %c3_i32, %c8_i32_33 : i32
    %110 = tpu.assume_multiple %109, 8 : i32
    %111 = arith.index_cast %110 : i32 to index
    %c0_34 = arith.constant 0 : index
    %112 = vector.load %arg11[%111, %c0_34] : memref<64x128xf32, #tpu.memory_space<vmem>>, vector<8x128xf32>
    %cst_35 = arith.constant dense<0.000000e+00> : vector<8x128xf32>
    %113 = tpu.matmul %106, %7, %cst_35 {dimension_numbers = #tpu.dot_dimension_numbers<[1], [0], [0], [1], [0, 0, 1, 1], [], []>} : vector<8x32xf32>, vector<32x128xf32>, vector<8x128xf32> -> vector<8x128xf32>
    %114 = arith.addf %112, %113 : vector<8x128xf32>
    %115 = vector.extract_strided_slice %114 {offsets = [0, 0], sizes = [8, 32], strides = [1, 1]} : vector<8x128xf32> to vector<8x32xf32>
    %116 = arith.negf %115 : vector<8x32xf32>
    %117 = math.exp %116 : vector<8x32xf32>
    %cst_36 = arith.constant 1.000000e+00 : f32
    %118 = vector.broadcast %cst_36 : f32 to vector<8x32xf32>
    %119 = arith.addf %118, %117 : vector<8x32xf32>
    %120 = arith.divf %118, %119 : vector<8x32xf32>
    %121 = vector.extract_strided_slice %114 {offsets = [0, 32], sizes = [8, 32], strides = [1, 1]} : vector<8x128xf32> to vector<8x32xf32>
    %122 = arith.negf %121 : vector<8x32xf32>
    %123 = math.exp %122 : vector<8x32xf32>
    %cst_37 = arith.constant 1.000000e+00 : f32
    %124 = vector.broadcast %cst_37 : f32 to vector<8x32xf32>
    %125 = arith.addf %124, %123 : vector<8x32xf32>
    %126 = arith.divf %124, %125 : vector<8x32xf32>
    %127 = vector.extract_strided_slice %114 {offsets = [0, 64], sizes = [8, 32], strides = [1, 1]} : vector<8x128xf32> to vector<8x32xf32>
    %128 = math.tanh %127 : vector<8x32xf32>
    %129 = vector.extract_strided_slice %114 {offsets = [0, 96], sizes = [8, 32], strides = [1, 1]} : vector<8x128xf32> to vector<8x32xf32>
    %130 = arith.negf %129 : vector<8x32xf32>
    %131 = math.exp %130 : vector<8x32xf32>
    %cst_38 = arith.constant 1.000000e+00 : f32
    %132 = vector.broadcast %cst_38 : f32 to vector<8x32xf32>
    %133 = arith.addf %132, %131 : vector<8x32xf32>
    %134 = arith.divf %132, %133 : vector<8x32xf32>
    %135 = arith.mulf %126, %104 : vector<8x32xf32>
    %136 = arith.mulf %120, %128 : vector<8x32xf32>
    %137 = arith.addf %135, %136 : vector<8x32xf32>
    %138 = math.tanh %137 : vector<8x32xf32>
    %139 = arith.mulf %134, %138 : vector<8x32xf32>
    %140 = arith.index_cast %110 : i32 to index
    %c0_39 = arith.constant 0 : index
    %141 = vector.load %arg12[%140, %c0_39] : memref<64x32xf32, #tpu.memory_space<vmem>>, vector<8x32xf32>
    tpu.vector_store %arg12[%140, %c0_39], %139 {strides = array<i32>} : memref<64x32xf32, #tpu.memory_space<vmem>>, vector<8x32xf32>,
    %c4_i32 = arith.constant 4 : i32
    %c8_i32_40 = arith.constant 8 : i32
    %142 = arith.muli %c4_i32, %c8_i32_40 : i32
    %143 = tpu.assume_multiple %142, 8 : i32
    %144 = arith.index_cast %143 : i32 to index
    %c0_41 = arith.constant 0 : index
    %145 = vector.load %arg11[%144, %c0_41] : memref<64x128xf32, #tpu.memory_space<vmem>>, vector<8x128xf32>
    %cst_42 = arith.constant dense<0.000000e+00> : vector<8x128xf32>
    %146 = tpu.matmul %139, %7, %cst_42 {dimension_numbers = #tpu.dot_dimension_numbers<[1], [0], [0], [1], [0, 0, 1, 1], [], []>} : vector<8x32xf32>, vector<32x128xf32>, vector<8x128xf32> -> vector<8x128xf32>
    %147 = arith.addf %145, %146 : vector<8x128xf32>
    %148 = vector.extract_strided_slice %147 {offsets = [0, 0], sizes = [8, 32], strides = [1, 1]} : vector<8x128xf32> to vector<8x32xf32>
    %149 = arith.negf %148 : vector<8x32xf32>
    %150 = math.exp %149 : vector<8x32xf32>
    %cst_43 = arith.constant 1.000000e+00 : f32
    %151 = vector.broadcast %cst_43 : f32 to vector<8x32xf32>
    %152 = arith.addf %151, %150 : vector<8x32xf32>
    %153 = arith.divf %151, %152 : vector<8x32xf32>
    %154 = vector.extract_strided_slice %147 {offsets = [0, 32], sizes = [8, 32], strides = [1, 1]} : vector<8x128xf32> to vector<8x32xf32>
    %155 = arith.negf %154 : vector<8x32xf32>
    %156 = math.exp %155 : vector<8x32xf32>
    %cst_44 = arith.constant 1.000000e+00 : f32
    %157 = vector.broadcast %cst_44 : f32 to vector<8x32xf32>
    %158 = arith.addf %157, %156 : vector<8x32xf32>
    %159 = arith.divf %157, %158 : vector<8x32xf32>
    %160 = vector.extract_strided_slice %147 {offsets = [0, 64], sizes = [8, 32], strides = [1, 1]} : vector<8x128xf32> to vector<8x32xf32>
    %161 = math.tanh %160 : vector<8x32xf32>
    %162 = vector.extract_strided_slice %147 {offsets = [0, 96], sizes = [8, 32], strides = [1, 1]} : vector<8x128xf32> to vector<8x32xf32>
    %163 = arith.negf %162 : vector<8x32xf32>
    %164 = math.exp %163 : vector<8x32xf32>
    %cst_45 = arith.constant 1.000000e+00 : f32
    %165 = vector.broadcast %cst_45 : f32 to vector<8x32xf32>
    %166 = arith.addf %165, %164 : vector<8x32xf32>
    %167 = arith.divf %165, %166 : vector<8x32xf32>
    %168 = arith.mulf %159, %137 : vector<8x32xf32>
    %169 = arith.mulf %153, %161 : vector<8x32xf32>
    %170 = arith.addf %168, %169 : vector<8x32xf32>
    %171 = math.tanh %170 : vector<8x32xf32>
    %172 = arith.mulf %167, %171 : vector<8x32xf32>
    %173 = arith.index_cast %143 : i32 to index
    %c0_46 = arith.constant 0 : index
    %174 = vector.load %arg12[%173, %c0_46] : memref<64x32xf32, #tpu.memory_space<vmem>>, vector<8x32xf32>
    tpu.vector_store %arg12[%173, %c0_46], %172 {strides = array<i32>} : memref<64x32xf32, #tpu.memory_space<vmem>>, vector<8x32xf32>,
    %c5_i32 = arith.constant 5 : i32
    %c8_i32_47 = arith.constant 8 : i32
    %175 = arith.muli %c5_i32, %c8_i32_47 : i32
    %176 = tpu.assume_multiple %175, 8 : i32
    %177 = arith.index_cast %176 : i32 to index
    %c0_48 = arith.constant 0 : index
    %178 = vector.load %arg11[%177, %c0_48] : memref<64x128xf32, #tpu.memory_space<vmem>>, vector<8x128xf32>
    %cst_49 = arith.constant dense<0.000000e+00> : vector<8x128xf32>
    %179 = tpu.matmul %172, %7, %cst_49 {dimension_numbers = #tpu.dot_dimension_numbers<[1], [0], [0], [1], [0, 0, 1, 1], [], []>} : vector<8x32xf32>, vector<32x128xf32>, vector<8x128xf32> -> vector<8x128xf32>
    %180 = arith.addf %178, %179 : vector<8x128xf32>
    %181 = vector.extract_strided_slice %180 {offsets = [0, 0], sizes = [8, 32], strides = [1, 1]} : vector<8x128xf32> to vector<8x32xf32>
    %182 = arith.negf %181 : vector<8x32xf32>
    %183 = math.exp %182 : vector<8x32xf32>
    %cst_50 = arith.constant 1.000000e+00 : f32
    %184 = vector.broadcast %cst_50 : f32 to vector<8x32xf32>
    %185 = arith.addf %184, %183 : vector<8x32xf32>
    %186 = arith.divf %184, %185 : vector<8x32xf32>
    %187 = vector.extract_strided_slice %180 {offsets = [0, 32], sizes = [8, 32], strides = [1, 1]} : vector<8x128xf32> to vector<8x32xf32>
    %188 = arith.negf %187 : vector<8x32xf32>
    %189 = math.exp %188 : vector<8x32xf32>
    %cst_51 = arith.constant 1.000000e+00 : f32
    %190 = vector.broadcast %cst_51 : f32 to vector<8x32xf32>
    %191 = arith.addf %190, %189 : vector<8x32xf32>
    %192 = arith.divf %190, %191 : vector<8x32xf32>
    %193 = vector.extract_strided_slice %180 {offsets = [0, 64], sizes = [8, 32], strides = [1, 1]} : vector<8x128xf32> to vector<8x32xf32>
    %194 = math.tanh %193 : vector<8x32xf32>
    %195 = vector.extract_strided_slice %180 {offsets = [0, 96], sizes = [8, 32], strides = [1, 1]} : vector<8x128xf32> to vector<8x32xf32>
    %196 = arith.negf %195 : vector<8x32xf32>
    %197 = math.exp %196 : vector<8x32xf32>
    %cst_52 = arith.constant 1.000000e+00 : f32
    %198 = vector.broadcast %cst_52 : f32 to vector<8x32xf32>
    %199 = arith.addf %198, %197 : vector<8x32xf32>
    %200 = arith.divf %198, %199 : vector<8x32xf32>
    %201 = arith.mulf %192, %170 : vector<8x32xf32>
    %202 = arith.mulf %186, %194 : vector<8x32xf32>
    %203 = arith.addf %201, %202 : vector<8x32xf32>
    %204 = math.tanh %203 : vector<8x32xf32>
    %205 = arith.mulf %200, %204 : vector<8x32xf32>
    %206 = arith.index_cast %176 : i32 to index
    %c0_53 = arith.constant 0 : index
    %207 = vector.load %arg12[%206, %c0_53] : memref<64x32xf32, #tpu.memory_space<vmem>>, vector<8x32xf32>
    tpu.vector_store %arg12[%206, %c0_53], %205 {strides = array<i32>} : memref<64x32xf32, #tpu.memory_space<vmem>>, vector<8x32xf32>,
    %c6_i32 = arith.constant 6 : i32
    %c8_i32_54 = arith.constant 8 : i32
    %208 = arith.muli %c6_i32, %c8_i32_54 : i32
    %209 = tpu.assume_multiple %208, 8 : i32
    %210 = arith.index_cast %209 : i32 to index
    %c0_55 = arith.constant 0 : index
    %211 = vector.load %arg11[%210, %c0_55] : memref<64x128xf32, #tpu.memory_space<vmem>>, vector<8x128xf32>
    %cst_56 = arith.constant dense<0.000000e+00> : vector<8x128xf32>
    %212 = tpu.matmul %205, %7, %cst_56 {dimension_numbers = #tpu.dot_dimension_numbers<[1], [0], [0], [1], [0, 0, 1, 1], [], []>} : vector<8x32xf32>, vector<32x128xf32>, vector<8x128xf32> -> vector<8x128xf32>
    %213 = arith.addf %211, %212 : vector<8x128xf32>
    %214 = vector.extract_strided_slice %213 {offsets = [0, 0], sizes = [8, 32], strides = [1, 1]} : vector<8x128xf32> to vector<8x32xf32>
    %215 = arith.negf %214 : vector<8x32xf32>
    %216 = math.exp %215 : vector<8x32xf32>
    %cst_57 = arith.constant 1.000000e+00 : f32
    %217 = vector.broadcast %cst_57 : f32 to vector<8x32xf32>
    %218 = arith.addf %217, %216 : vector<8x32xf32>
    %219 = arith.divf %217, %218 : vector<8x32xf32>
    %220 = vector.extract_strided_slice %213 {offsets = [0, 32], sizes = [8, 32], strides = [1, 1]} : vector<8x128xf32> to vector<8x32xf32>
    %221 = arith.negf %220 : vector<8x32xf32>
    %222 = math.exp %221 : vector<8x32xf32>
    %cst_58 = arith.constant 1.000000e+00 : f32
    %223 = vector.broadcast %cst_58 : f32 to vector<8x32xf32>
    %224 = arith.addf %223, %222 : vector<8x32xf32>
    %225 = arith.divf %223, %224 : vector<8x32xf32>
    %226 = vector.extract_strided_slice %213 {offsets = [0, 64], sizes = [8, 32], strides = [1, 1]} : vector<8x128xf32> to vector<8x32xf32>
    %227 = math.tanh %226 : vector<8x32xf32>
    %228 = vector.extract_strided_slice %213 {offsets = [0, 96], sizes = [8, 32], strides = [1, 1]} : vector<8x128xf32> to vector<8x32xf32>
    %229 = arith.negf %228 : vector<8x32xf32>
    %230 = math.exp %229 : vector<8x32xf32>
    %cst_59 = arith.constant 1.000000e+00 : f32
    %231 = vector.broadcast %cst_59 : f32 to vector<8x32xf32>
    %232 = arith.addf %231, %230 : vector<8x32xf32>
    %233 = arith.divf %231, %232 : vector<8x32xf32>
    %234 = arith.mulf %225, %203 : vector<8x32xf32>
    %235 = arith.mulf %219, %227 : vector<8x32xf32>
    %236 = arith.addf %234, %235 : vector<8x32xf32>
    %237 = math.tanh %236 : vector<8x32xf32>
    %238 = arith.mulf %233, %237 : vector<8x32xf32>
    %239 = arith.index_cast %209 : i32 to index
    %c0_60 = arith.constant 0 : index
    %240 = vector.load %arg12[%239, %c0_60] : memref<64x32xf32, #tpu.memory_space<vmem>>, vector<8x32xf32>
    tpu.vector_store %arg12[%239, %c0_60], %238 {strides = array<i32>} : memref<64x32xf32, #tpu.memory_space<vmem>>, vector<8x32xf32>,
    %c7_i32 = arith.constant 7 : i32
    %c8_i32_61 = arith.constant 8 : i32
    %241 = arith.muli %c7_i32, %c8_i32_61 : i32
    %242 = tpu.assume_multiple %241, 8 : i32
    %243 = arith.index_cast %242 : i32 to index
    %c0_62 = arith.constant 0 : index
    %244 = vector.load %arg11[%243, %c0_62] : memref<64x128xf32, #tpu.memory_space<vmem>>, vector<8x128xf32>
    %cst_63 = arith.constant dense<0.000000e+00> : vector<8x128xf32>
    %245 = tpu.matmul %238, %7, %cst_63 {dimension_numbers = #tpu.dot_dimension_numbers<[1], [0], [0], [1], [0, 0, 1, 1], [], []>} : vector<8x32xf32>, vector<32x128xf32>, vector<8x128xf32> -> vector<8x128xf32>
    %246 = arith.addf %244, %245 : vector<8x128xf32>
    %247 = vector.extract_strided_slice %246 {offsets = [0, 0], sizes = [8, 32], strides = [1, 1]} : vector<8x128xf32> to vector<8x32xf32>
    %248 = arith.negf %247 : vector<8x32xf32>
    %249 = math.exp %248 : vector<8x32xf32>
    %cst_64 = arith.constant 1.000000e+00 : f32
    %250 = vector.broadcast %cst_64 : f32 to vector<8x32xf32>
    %251 = arith.addf %250, %249 : vector<8x32xf32>
    %252 = arith.divf %250, %251 : vector<8x32xf32>
    %253 = vector.extract_strided_slice %246 {offsets = [0, 32], sizes = [8, 32], strides = [1, 1]} : vector<8x128xf32> to vector<8x32xf32>
    %254 = arith.negf %253 : vector<8x32xf32>
    %255 = math.exp %254 : vector<8x32xf32>
    %cst_65 = arith.constant 1.000000e+00 : f32
    %256 = vector.broadcast %cst_65 : f32 to vector<8x32xf32>
    %257 = arith.addf %256, %255 : vector<8x32xf32>
    %258 = arith.divf %256, %257 : vector<8x32xf32>
    %259 = vector.extract_strided_slice %246 {offsets = [0, 64], sizes = [8, 32], strides = [1, 1]} : vector<8x128xf32> to vector<8x32xf32>
    %260 = math.tanh %259 : vector<8x32xf32>
    %261 = vector.extract_strided_slice %246 {offsets = [0, 96], sizes = [8, 32], strides = [1, 1]} : vector<8x128xf32> to vector<8x32xf32>
    %262 = arith.negf %261 : vector<8x32xf32>
    %263 = math.exp %262 : vector<8x32xf32>
    %cst_66 = arith.constant 1.000000e+00 : f32
    %264 = vector.broadcast %cst_66 : f32 to vector<8x32xf32>
    %265 = arith.addf %264, %263 : vector<8x32xf32>
    %266 = arith.divf %264, %265 : vector<8x32xf32>
    %267 = arith.mulf %258, %236 : vector<8x32xf32>
    %268 = arith.mulf %252, %260 : vector<8x32xf32>
    %269 = arith.addf %267, %268 : vector<8x32xf32>
    %270 = math.tanh %269 : vector<8x32xf32>
    %271 = arith.mulf %266, %270 : vector<8x32xf32>
    %272 = arith.index_cast %242 : i32 to index
    %c0_67 = arith.constant 0 : index
    %273 = vector.load %arg12[%272, %c0_67] : memref<64x32xf32, #tpu.memory_space<vmem>>, vector<8x32xf32>
    tpu.vector_store %arg12[%272, %c0_67], %271 {strides = array<i32>} : memref<64x32xf32, #tpu.memory_space<vmem>>, vector<8x32xf32>,
    %c8_i32_68 = arith.constant 8 : i32
    %c0_69 = arith.constant 0 : index
    %c0_70 = arith.constant 0 : index
    %274 = vector.load %arg9[%c0_69, %c0_70] : memref<8x32xf32, #tpu.memory_space<vmem>>, vector<8x32xf32>
    tpu.vector_store %arg9[%c0_69, %c0_70], %271 {strides = array<i32>} : memref<8x32xf32, #tpu.memory_space<vmem>>, vector<8x32xf32>,
    %c0_71 = arith.constant 0 : index
    %c0_72 = arith.constant 0 : index
    %275 = vector.load %arg10[%c0_71, %c0_72] : memref<8x32xf32, #tpu.memory_space<vmem>>, vector<8x32xf32>
    tpu.vector_store %arg10[%c0_71, %c0_72], %269 {strides = array<i32>} : memref<8x32xf32, #tpu.memory_space<vmem>>, vector<8x32xf32>,
    %c0_73 = arith.constant 0 : index
    %c0_74 = arith.constant 0 : index
    %276 = vector.load %arg12[%c0_73, %c0_74] : memref<64x32xf32, #tpu.memory_space<vmem>>, vector<64x32xf32>
    %c0_75 = arith.constant 0 : index
    %c0_76 = arith.constant 0 : index
    %277 = vector.load %arg6[%c0_75, %c0_76] : memref<32x128xf32, #tpu.memory_space<vmem>>, vector<32x128xf32>
    %cst_77 = arith.constant dense<0.000000e+00> : vector<64x128xf32>
    %278 = tpu.matmul %276, %277, %cst_77 {dimension_numbers = #tpu.dot_dimension_numbers<[1], [0], [0], [1], [0, 0, 1, 1], [], []>} : vector<64x32xf32>, vector<32x128xf32>, vector<64x128xf32> -> vector<64x128xf32>
    %c0_78 = arith.constant 0 : index
    %c0_79 = arith.constant 0 : index
    %279 = vector.load %arg7[%c0_78, %c0_79] : memref<1x128xf32, #tpu.memory_space<vmem>>, vector<1x128xf32>
    %280 = vector.broadcast %279 : vector<1x128xf32> to vector<64x128xf32>
    %281 = arith.addf %278, %280 : vector<64x128xf32>
    %c0_80 = arith.constant 0 : index
    %c0_81 = arith.constant 0 : index
    %282 = vector.load %arg8[%c0_80, %c0_81] : memref<64x128xf32, #tpu.memory_space<vmem>>, vector<64x128xf32>
    tpu.vector_store %arg8[%c0_80, %c0_81], %281 {strides = array<i32>} : memref<64x128xf32, #tpu.memory_space<vmem>>, vector<64x128xf32>,
    return
  }
}

</mosaic_0001>

<llo_original>
// kernel: tpu_custom_call.1
$region0: #{tpu_custom_call.1}
  #allocation0 [shape = 'u32[]', space=smem, size = 0x4, offset = 0x4, fixed_abs, tag = 'smem constant byte address 0x4 - core index']
  #allocation1 [shape = 'u32[72,128]{1,0:T(1,128)}', space=vmem, size = 0x9000, scoped, tag = 'internal scratch']
  #allocation2 [shape = 'f32[64,128]{1,0:T(8,128)}', space=vmem, size = 0x8000, scoped, tag = 'scratch operand']
  #allocation3 [shape = 'f32[64,32]{1,0:T(8,128)}', space=vmem, size = 0x8000, scoped, tag = 'scratch operand']
  %s0 = inlined_call_operand.vmem [shape: f32[64,32], index: 0, kind: input, shape index: {}]
  %s1 = inlined_call_operand.hbm [shape: f32[8,32], index: 1, kind: input, shape index: {}]
  %s2 = inlined_call_operand.hbm [shape: f32[8,32], index: 2, kind: input, shape index: {}]
  %s3 = inlined_call_operand.vmem [shape: f32[32,128], index: 3, kind: input, shape index: {}]
  %s4 = inlined_call_operand.vmem [shape: f32[32,128], index: 4, kind: input, shape index: {}]
  %s5 = inlined_call_operand.vmem [shape: f32[1,128], index: 5, kind: input, shape index: {}]
  %s6 = inlined_call_operand.vmem [shape: f32[32,128], index: 6, kind: input, shape index: {}]
  %s7 = inlined_call_operand.vmem [shape: f32[1,128], index: 7, kind: input, shape index: {}]
  %s8 = inlined_call_operand.hbm [shape: f32[64,128], index: 8, kind: output, shape index: {0}]
  %s9 = inlined_call_operand.hbm [shape: f32[8,32], index: 9, kind: output, shape index: {1}]
  %s10 = inlined_call_operand.hbm [shape: f32[8,32], index: 10, kind: output, shape index: {2}]
  %11 = xla_tuple %s8, %s9, %s10
  %s12 = sld [smem:[#allocation0]]
  $region66: #{tpu_custom_call.1} parent=0
    _
  %s14 = ssub.s32 1, %s12
  %s15 = scalar_select 0, %s14, %s12
  $region1: #{tpu_custom_call.1} parent=0
    #allocation4 [shape = 'u8[4096]{0}', space=vmem, size = 0x1000, scoped, tag = 'input window, operand 1, single buffered']
    #allocation5 [shape = 's32[1]{0}', space=sflag, size = 0x4, scoped, tag = 'scoped memory for tpu_custom_call.1']
    #allocation6 [shape = 's32[1]{0}', space=sflag, size = 0x4, scoped, tag = 'scoped memory for tpu_custom_call.1']
    #allocation7 [shape = 'u8[4096]{0}', space=vmem, size = 0x1000, scoped, tag = 'input window, operand 2, single buffered']
    #allocation8 [shape = 's32[1]{0}', space=sflag, size = 0x4, scoped, tag = 'scoped memory for tpu_custom_call.1']
    #allocation9 [shape = 'u8[32768]{0}', space=vmem, size = 0x8000, scoped, tag = 'output window, operand 0, single buffered']
    #allocation10 [shape = 'u8[4096]{0}', space=vmem, size = 0x1000, scoped, tag = 'output window, operand 1, single buffered']
    #allocation11 [shape = 's32[1]{0}', space=sflag, size = 0x4, scoped, tag = 'scoped memory for tpu_custom_call.1']
    #allocation12 [shape = 'u8[4096]{0}', space=vmem, size = 0x1000, scoped, tag = 'output window, operand 2, single buffered']
    %16 = vsyncpa [#allocation5], 0
    %17 = vsyncpa [#allocation8], 0
    %18 = vsyncpa [#allocation6], 0
    %19 = vsyncpa [#allocation11], 0
    // Predicated region
    $region2: #{tpu_custom_call.1} parent=1 // pred_check
      _
    $region3: #{tpu_custom_call.1} parent=1 // pred_check_branch
      %21 = sbr.rel (0) target = $region5
    $region4: #{tpu_custom_call.1} parent=1 // pred_region
      _
    $region5: #{tpu_custom_call.1} parent=1 // pred_fallthru
      _
    // Predicated region
    $region6: #{tpu_custom_call.1} parent=1 // pred_check
      _
    $region7: #{tpu_custom_call.1} parent=1 // pred_check_branch
      %23 = sbr.rel (0) target = $region9
    $region8: #{tpu_custom_call.1} parent=1 // pred_region
      %25 = vsyncadd [#allocation5], 0
      %s27 = sshll.u32 %s1, 4
      %s28 = int_to_ptr.hbm [resolvable:$true] %s27
      %s29 = sshll.u32 [#allocation4], 4
      %s30 = int_to_ptr.vmem [resolvable:$true] %s29
      %32 = dma.hbm_to_vmem [thread:$0]  %s28, 128, %s30, [#allocation5]
    $region9: #{tpu_custom_call.1} parent=1 // pred_fallthru
      _
    // Predicated region
    $region10: #{tpu_custom_call.1} parent=1 // pred_check
      _
    $region11: #{tpu_custom_call.1} parent=1 // pred_check_branch
      %34 = sbr.rel (0) target = $region13
    $region12: #{tpu_custom_call.1} parent=1 // pred_region
      %36 = vsyncadd [#allocation8], 0
      %s38 = sshll.u32 %s2, 4
      %s39 = int_to_ptr.hbm [resolvable:$true] %s38
      %s40 = sshll.u32 [#allocation7], 4
      %s41 = int_to_ptr.vmem [resolvable:$true] %s40
      %43 = dma.hbm_to_vmem [thread:$0]  %s39, 128, %s41, [#allocation8]
    $region13: #{tpu_custom_call.1} parent=1 // pred_fallthru
      _
    // Predicated region
    $region14: #{tpu_custom_call.1} parent=1 // pred_check
      _
    $region15: #{tpu_custom_call.1} parent=1 // pred_check_branch
      %45 = sbr.rel (0) target = $region17
    $region16: #{tpu_custom_call.1} parent=1 // pred_region
      _
    $region17: #{tpu_custom_call.1} parent=1 // pred_fallthru
      _
    // Predicated region
    $region18: #{tpu_custom_call.1} parent=1 // pred_check
      _
    $region19: #{tpu_custom_call.1} parent=1 // pred_check_branch
      %47 = sbr.rel (0) target = $region21
    $region20: #{tpu_custom_call.1} parent=1 // pred_region
      _
    $region21: #{tpu_custom_call.1} parent=1 // pred_fallthru
      _
    // Predicated region
    $region22: #{tpu_custom_call.1} parent=1 // pred_check
      _
    $region23: #{tpu_custom_call.1} parent=1 // pred_check_branch
      %49 = sbr.rel (0) target = $region25
    $region24: #{tpu_custom_call.1} parent=1 // pred_region
      _
    $region25: #{tpu_custom_call.1} parent=1 // pred_fallthru
      _
    // Predicated region
    $region26: #{tpu_custom_call.1} parent=1 // pred_check
      _
    $region27: #{tpu_custom_call.1} parent=1 // pred_check_branch
      %51 = sbr.rel (0) target = $region29
    $region28: #{tpu_custom_call.1} parent=1 // pred_region
      _
    $region29: #{tpu_custom_call.1} parent=1 // pred_fallthru
      _
    // Predicated region
    $region30: #{tpu_custom_call.1} parent=1 // pred_check
      _
    $region31: #{tpu_custom_call.1} parent=1 // pred_check_branch
      %53 = sbr.rel (0) target = $region33
    $region32: #{tpu_custom_call.1} parent=1 // pred_region
      _
    $region33: #{tpu_custom_call.1} parent=1 // pred_fallthru
      _
    // Predicated region
    $region34: #{tpu_custom_call.1} parent=1 // pred_check
      _
    $region35: #{tpu_custom_call.1} parent=1 // pred_check_branch
      %55 = sbr.rel (0) target = $region37
    $region36: #{tpu_custom_call.1} parent=1 // pred_region
      %57 = dma.done [#allocation5], 128
    $region37: #{tpu_custom_call.1} parent=1 // pred_fallthru
      _
    // Predicated region
    $region38: #{tpu_custom_call.1} parent=1 // pred_check
      _
    $region39: #{tpu_custom_call.1} parent=1 // pred_check_branch
      %59 = sbr.rel (0) target = $region41
    $region40: #{tpu_custom_call.1} parent=1 // pred_region
      %61 = dma.done [#allocation8], 128
    $region41: #{tpu_custom_call.1} parent=1 // pred_fallthru
      _
    %v62 = vld [vmem:[%s0] sm:$0xff]
    %v63 = vld [vmem:[%s0 + $0x8] sm:$0xff]
    %v64 = vld [vmem:[%s0 + $0x10] sm:$0xff]
    %v65 = vld [vmem:[%s0 + $0x18] sm:$0xff]
    %v66 = vld [vmem:[%s0 + $0x20] sm:$0xff]
    %v67 = vld [vmem:[%s0 + $0x28] sm:$0xff]
    %v68 = vld [vmem:[%s0 + $0x30] sm:$0xff]
    %v69 = vld [vmem:[%s0 + $0x38] sm:$0xff]
    %v70 = vld [vmem:[%s3] sm:$0xff]
    %v71 = vld [vmem:[%s3 + $0x8] sm:$0xff]
    %v72 = vld [vmem:[%s3 + $0x10] sm:$0xff]
    %v73 = vld [vmem:[%s3 + $0x18] sm:$0xff]
    %v74 = vld [vmem:[%s5] sm:$0x1]
    %v76 = vperm.slane %v74, 0
    %vm78 = vcmask 261120
    %v80 = vsel %vm78, %v62, 0
    %v83 = vsel %vm78, %v63, 0
    %v86 = vsel %vm78, %v64, 0
    %v89 = vsel %vm78, %v65, 0
    %v92 = vsel %vm78, %v66, 0
    %v95 = vsel %vm78, %v67, 0
    %v98 = vsel %vm78, %v68, 0
    %v101 = vsel %vm78, %v69, 0
    %103 = vmatpush.msra.mxu0 0.0
    %104 = vmatpush.msra.mxu0 0.0
    %105 = vmatpush.msra.mxu0 0.0
    %106 = vmatpush.msra.mxu0 0.0
    %107 = vmatpush.msra.mxu0 0.0
    %108 = vmatpush.msra.mxu0 0.0
    %109 = vmatpush.msra.mxu0 0.0
    %110 = vmatpush.msra.mxu0 0.0
    %111 = vmatpush.msra.mxu0 0.0
    %112 = vmatpush.msra.mxu0 0.0
    %113 = vmatpush.msra.mxu0 0.0
    %114 = vmatpush.msra.mxu0 0.0
    %115 = vmatpush.msra.mxu0 %v73
    %116 = vmatpush.msra.mxu0 %v72
    %117 = vmatpush.msra.mxu0 %v71
    %118 = vmatpush.msra.mxu0 %v70
    %119 = vmatmul.f32.gmra.mxu0 %v80
    %v120 = vpop.f32.mrf.mxu0
    %v121 = vadd.f32 %v76, %v120
    %122 = vmatmul.f32.gmra.mxu0 %v83
    %v123 = vpop.f32.mrf.mxu0
    %v124 = vadd.f32 %v76, %v123
    %125 = vmatmul.f32.gmra.mxu0 %v86
    %v126 = vpop.f32.mrf.mxu0
    %v127 = vadd.f32 %v76, %v126
    %128 = vmatmul.f32.gmra.mxu0 %v89
    %v129 = vpop.f32.mrf.mxu0
    %v130 = vadd.f32 %v76, %v129
    %131 = vmatmul.f32.gmra.mxu0 %v92
    %v132 = vpop.f32.mrf.mxu0
    %v133 = vadd.f32 %v76, %v132
    %134 = vmatmul.f32.gmra.mxu0 %v95
    %v135 = vpop.f32.mrf.mxu0
    %v136 = vadd.f32 %v76, %v135
    %137 = vmatmul.f32.gmra.mxu0 %v98
    %v138 = vpop.f32.mrf.mxu0
    %v139 = vadd.f32 %v76, %v138
    %140 = vmatmul.f32.gmra.mxu0 %v101
    %v141 = vpop.f32.mrf.mxu0
    %v142 = vadd.f32 %v76, %v141
    %143 = vdwg.mxu0
    %144 = vst [vmem:[#allocation2] sm:$0xff] %v121
    %145 = vst [vmem:[#allocation2 + $0x8] sm:$0xff] %v124
    %146 = vst [vmem:[#allocation2 + $0x10] sm:$0xff] %v127
    %147 = vst [vmem:[#allocation2 + $0x18] sm:$0xff] %v130
    %148 = vst [vmem:[#allocation2 + $0x20] sm:$0xff] %v133
    %149 = vst [vmem:[#allocation2 + $0x28] sm:$0xff] %v136
    %150 = vst [vmem:[#allocation2 + $0x30] sm:$0xff] %v139
    %151 = vst [vmem:[#allocation2 + $0x38] sm:$0xff] %v142
    %v152 = vld [vmem:[%s4] sm:$0xff]
    %v153 = vld [vmem:[%s4 + $0x8] sm:$0xff]
    %v154 = vld [vmem:[%s4 + $0x10] sm:$0xff]
    %v155 = vld [vmem:[%s4 + $0x18] sm:$0xff]
    %v156 = vld [vmem:[#allocation4] sm:$0xff]
    %v157 = vld [vmem:[#allocation7] sm:$0xff]
    %v158 = vld [vmem:[#allocation2] sm:$0xff]
    %v160 = vsel %vm78, %v156, 0
    %162 = vmatpush.msra.mxu0 0.0
    %163 = vmatpush.msra.mxu0 0.0
    %164 = vmatpush.msra.mxu0 0.0
    %165 = vmatpush.msra.mxu0 0.0
    %166 = vmatpush.msra.mxu0 0.0
    %167 = vmatpush.msra.mxu0 0.0
    %168 = vmatpush.msra.mxu0 0.0
    %169 = vmatpush.msra.mxu0 0.0
    %170 = vmatpush.msra.mxu0 0.0
    %171 = vmatpush.msra.mxu0 0.0
    %172 = vmatpush.msra.mxu0 0.0
    %173 = vmatpush.msra.mxu0 0.0
    %174 = vmatpush.msra.mxu0 %v155
    %175 = vmatpush.msra.mxu0 %v154
    %176 = vmatpush.msra.mxu0 %v153
    %177 = vmatpush.msra.mxu0 %v152
    %178 = vmatmul.f32.gmra.mxu0 %v160
    %v179 = vpop.f32.mrf.mxu0
    %v180 = vadd.f32 0.0, %v179
    %181 = vdwg.mxu0
    %v182 = vadd.f32 %v158, %v180
    %v183 = vxor.u32 %v182, 2147483648
    %v184 = vmul.f32 %v183, 1.442695
    %v185 = vpow.pop %v184
    %v186 = vadd.f32 %v185, 1.0
    %v187 = vrcp.pop %v186
    %v188 = vmul.f32 %v186, %v187
    %v189 = vsub.f32 1.0, %v188
    %v190 = vmul.f32 %v187, %v189
    %v191 = vadd.f32 %v187, %v190
    %vm192 = vweird.f32 %v186
    %vm193 = vweird.f32 %v187
    %vm194 = vmor %vm192, %vm193
    %v195 = vsel %vm194, %v187, %v191
    %v196 = vand.u32 2147483647, %v186
    %vm197 = vcmp.eq.f32.partialorder %v196, 8.507059e+37
    %v198 = vand.u32 %v186, 2147483648
    %v199 = vor.u32 1.1754944e-38, %v198
    %v200 = vsel %vm197, %v199, %v195
    %v201 = vmul.f32 1.0, %v200
    %v202 = vtanh.pop %v182
    %204 = vrot.lane.b32.xlu0 %v157, 32
    %v205 = vpop.permute.xlu0 %204
    %v207 = vmul.f32 %v201, %v205
    %209 = vrot.lane.b32.xlu0 %v202, 64
    %v210 = vpop.permute.xlu0 %209
    %v212 = vmul.f32 %v201, %v210
    %214 = vrot.lane.b32.xlu0 %v212, 32
    %v215 = vpop.permute.xlu0 %214
    %v217 = vadd.f32 %v207, %v215
    %v218 = vtanh.pop %v217
    %220 = vrot.lane.b32.xlu0 %v218, 64
    %v221 = vpop.permute.xlu0 %220
    %v223 = vmul.f32 %v201, %v221
    %225 = vrot.lane.b32.xlu0 %v223, 32
    %v226 = vpop.permute.xlu0 %225
    %228 = vst.msk [vmem:[#allocation3] sm:$0xff] %vm78, %v226
    %s229 = scalar_lea.vmem [#allocation2], 8
    %v230 = vld [vmem:[%s229] sm:$0xff]
    %v231 = vsel %vm78, %v226, 0
    %233 = vmatpush.msra.mxu0 0.0
    %234 = vmatpush.msra.mxu0 0.0
    %235 = vmatpush.msra.mxu0 0.0
    %236 = vmatpush.msra.mxu0 0.0
    %237 = vmatpush.msra.mxu0 0.0
    %238 = vmatpush.msra.mxu0 0.0
    %239 = vmatpush.msra.mxu0 0.0
    %240 = vmatpush.msra.mxu0 0.0
    %241 = vmatpush.msra.mxu0 0.0
    %242 = vmatpush.msra.mxu0 0.0
    %243 = vmatpush.msra.mxu0 0.0
    %244 = vmatpush.msra.mxu0 0.0
    %245 = vmatpush.msra.mxu0 %v155
    %246 = vmatpush.msra.mxu0 %v154
    %247 = vmatpush.msra.mxu0 %v153
    %248 = vmatpush.msra.mxu0 %v152
    %249 = vmatmul.f32.gmra.mxu0 %v231
    %v250 = vpop.f32.mrf.mxu0
    %v251 = vadd.f32 0.0, %v250
    %252 = vdwg.mxu0
    %v253 = vadd.f32 %v230, %v251
    %v254 = vxor.u32 %v253, 2147483648
    %v255 = vmul.f32 %v254, 1.442695
    %v256 = vpow.pop %v255
    %v257 = vadd.f32 %v256, 1.0
    %v258 = vrcp.pop %v257
    %v259 = vmul.f32 %v257, %v258
    %v260 = vsub.f32 1.0, %v259
    %v261 = vmul.f32 %v258, %v260
    %v262 = vadd.f32 %v258, %v261
    %vm263 = vweird.f32 %v257
    %vm264 = vweird.f32 %v258
    %vm265 = vmor %vm263, %vm264
    %v266 = vsel %vm265, %v258, %v262
    %v267 = vand.u32 2147483647, %v257
    %vm268 = vcmp.eq.f32.partialorder %v267, 8.507059e+37
    %v269 = vand.u32 %v257, 2147483648
    %v270 = vor.u32 1.1754944e-38, %v269
    %v271 = vsel %vm268, %v270, %v266
    %v272 = vmul.f32 1.0, %v271
    %v273 = vtanh.pop %v253
    %v274 = vmul.f32 %v272, %v217
    %276 = vrot.lane.b32.xlu0 %v273, 64
    %v277 = vpop.permute.xlu0 %276
    %v279 = vmul.f32 %v272, %v277
    %281 = vrot.lane.b32.xlu0 %v279, 32
    %v282 = vpop.permute.xlu0 %281
    %v284 = vadd.f32 %v274, %v282
    %v285 = vtanh.pop %v284
    %287 = vrot.lane.b32.xlu0 %v285, 64
    %v288 = vpop.permute.xlu0 %287
    %v290 = vmul.f32 %v272, %v288
    %292 = vrot.lane.b32.xlu0 %v290, 32
    %v293 = vpop.permute.xlu0 %292
    %s295 = scalar_lea.vmem [#allocation3], 8
    %296 = vst.msk [vmem:[%s295] sm:$0xff] %vm78, %v293
    %s297 = scalar_lea.vmem [#allocation2], 16
    %v298 = vld [vmem:[%s297] sm:$0xff]
    %v299 = vsel %vm78, %v293, 0
    %301 = vmatpush.msra.mxu0 0.0
    %302 = vmatpush.msra.mxu0 0.0
    %303 = vmatpush.msra.mxu0 0.0
    %304 = vmatpush.msra.mxu0 0.0
    %305 = vmatpush.msra.mxu0 0.0
    %306 = vmatpush.msra.mxu0 0.0
    %307 = vmatpush.msra.mxu0 0.0
    %308 = vmatpush.msra.mxu0 0.0
    %309 = vmatpush.msra.mxu0 0.0
    %310 = vmatpush.msra.mxu0 0.0
    %311 = vmatpush.msra.mxu0 0.0
    %312 = vmatpush.msra.mxu0 0.0
    %313 = vmatpush.msra.mxu0 %v155
    %314 = vmatpush.msra.mxu0 %v154
    %315 = vmatpush.msra.mxu0 %v153
    %316 = vmatpush.msra.mxu0 %v152
    %317 = vmatmul.f32.gmra.mxu0 %v299
    %v318 = vpop.f32.mrf.mxu0
    %v319 = vadd.f32 0.0, %v318
    %320 = vdwg.mxu0
    %v321 = vadd.f32 %v298, %v319
    %v322 = vxor.u32 %v321, 2147483648
    %v323 = vmul.f32 %v322, 1.442695
    %v324 = vpow.pop %v323
    %v325 = vadd.f32 %v324, 1.0
    %v326 = vrcp.pop %v325
    %v327 = vmul.f32 %v325, %v326
    %v328 = vsub.f32 1.0, %v327
    %v329 = vmul.f32 %v326, %v328
    %v330 = vadd.f32 %v326, %v329
    %vm331 = vweird.f32 %v325
    %vm332 = vweird.f32 %v326
    %vm333 = vmor %vm331, %vm332
    %v334 = vsel %vm333, %v326, %v330
    %v335 = vand.u32 2147483647, %v325
    %vm336 = vcmp.eq.f32.partialorder %v335, 8.507059e+37
    %v337 = vand.u32 %v325, 2147483648
    %v338 = vor.u32 1.1754944e-38, %v337
    %v339 = vsel %vm336, %v338, %v334
    %v340 = vmul.f32 1.0, %v339
    %v341 = vtanh.pop %v321
    %v342 = vmul.f32 %v340, %v284
    %344 = vrot.lane.b32.xlu0 %v341, 64
    %v345 = vpop.permute.xlu0 %344
    %v347 = vmul.f32 %v340, %v345
    %349 = vrot.lane.b32.xlu0 %v347, 32
    %v350 = vpop.permute.xlu0 %349
    %v352 = vadd.f32 %v342, %v350
    %v353 = vtanh.pop %v352
    %355 = vrot.lane.b32.xlu0 %v353, 64
    %v356 = vpop.permute.xlu0 %355
    %v358 = vmul.f32 %v340, %v356
    %360 = vrot.lane.b32.xlu0 %v358, 32
    %v361 = vpop.permute.xlu0 %360
    %s363 = scalar_lea.vmem [#allocation3], 16
    %364 = vst.msk [vmem:[%s363] sm:$0xff] %vm78, %v361
    %s365 = scalar_lea.vmem [#allocation2], 24
    %v366 = vld [vmem:[%s365] sm:$0xff]
    %v367 = vsel %vm78, %v361, 0
    %369 = vmatpush.msra.mxu0 0.0
    %370 = vmatpush.msra.mxu0 0.0
    %371 = vmatpush.msra.mxu0 0.0
    %372 = vmatpush.msra.mxu0 0.0
    %373 = vmatpush.msra.mxu0 0.0
    %374 = vmatpush.msra.mxu0 0.0
    %375 = vmatpush.msra.mxu0 0.0
    %376 = vmatpush.msra.mxu0 0.0
    %377 = vmatpush.msra.mxu0 0.0
    %378 = vmatpush.msra.mxu0 0.0
    %379 = vmatpush.msra.mxu0 0.0
    %380 = vmatpush.msra.mxu0 0.0
    %381 = vmatpush.msra.mxu0 %v155
    %382 = vmatpush.msra.mxu0 %v154
    %383 = vmatpush.msra.mxu0 %v153
    %384 = vmatpush.msra.mxu0 %v152
    %385 = vmatmul.f32.gmra.mxu0 %v367
    %v386 = vpop.f32.mrf.mxu0
    %v387 = vadd.f32 0.0, %v386
    %388 = vdwg.mxu0
    %v389 = vadd.f32 %v366, %v387
    %v390 = vxor.u32 %v389, 2147483648
    %v391 = vmul.f32 %v390, 1.442695
    %v392 = vpow.pop %v391
    %v393 = vadd.f32 %v392, 1.0
    %v394 = vrcp.pop %v393
    %v395 = vmul.f32 %v393, %v394
    %v396 = vsub.f32 1.0, %v395
    %v397 = vmul.f32 %v394, %v396
    %v398 = vadd.f32 %v394, %v397
    %vm399 = vweird.f32 %v393
    %vm400 = vweird.f32 %v394
    %vm401 = vmor %vm399, %vm400
    %v402 = vsel %vm401, %v394, %v398
    %v403 = vand.u32 2147483647, %v393
    %vm404 = vcmp.eq.f32.partialorder %v403, 8.507059e+37
    %v405 = vand.u32 %v393, 2147483648
    %v406 = vor.u32 1.1754944e-38, %v405
    %v407 = vsel %vm404, %v406, %v402
    %v408 = vmul.f32 1.0, %v407
    %v409 = vtanh.pop %v389
    %v410 = vmul.f32 %v408, %v352
    %412 = vrot.lane.b32.xlu0 %v409, 64
    %v413 = vpop.permute.xlu0 %412
    %v415 = vmul.f32 %v408, %v413
    %417 = vrot.lane.b32.xlu0 %v415, 32
    %v418 = vpop.permute.xlu0 %417
    %v420 = vadd.f32 %v410, %v418
    %v421 = vtanh.pop %v420
    %423 = vrot.lane.b32.xlu0 %v421, 64
    %v424 = vpop.permute.xlu0 %423
    %v426 = vmul.f32 %v408, %v424
    %428 = vrot.lane.b32.xlu0 %v426, 32
    %v429 = vpop.permute.xlu0 %428
    %s431 = scalar_lea.vmem [#allocation3], 24
    %432 = vst.msk [vmem:[%s431] sm:$0xff] %vm78, %v429
    %s433 = scalar_lea.vmem [#allocation2], 32
    %v434 = vld [vmem:[%s433] sm:$0xff]
    %v435 = vsel %vm78, %v429, 0
    %437 = vmatpush.msra.mxu0 0.0
    %438 = vmatpush.msra.mxu0 0.0
    %439 = vmatpush.msra.mxu0 0.0
    %440 = vmatpush.msra.mxu0 0.0
    %441 = vmatpush.msra.mxu0 0.0
    %442 = vmatpush.msra.mxu0 0.0
    %443 = vmatpush.msra.mxu0 0.0
    %444 = vmatpush.msra.mxu0 0.0
    %445 = vmatpush.msra.mxu0 0.0
    %446 = vmatpush.msra.mxu0 0.0
    %447 = vmatpush.msra.mxu0 0.0
    %448 = vmatpush.msra.mxu0 0.0
    %449 = vmatpush.msra.mxu0 %v155
    %450 = vmatpush.msra.mxu0 %v154
    %451 = vmatpush.msra.mxu0 %v153
    %452 = vmatpush.msra.mxu0 %v152
    %453 = vmatmul.f32.gmra.mxu0 %v435
    %v454 = vpop.f32.mrf.mxu0
    %v455 = vadd.f32 0.0, %v454
    %456 = vdwg.mxu0
    %v457 = vadd.f32 %v434, %v455
    %v458 = vxor.u32 %v457, 2147483648
    %v459 = vmul.f32 %v458, 1.442695
    %v460 = vpow.pop %v459
    %v461 = vadd.f32 %v460, 1.0
    %v462 = vrcp.pop %v461
    %v463 = vmul.f32 %v461, %v462
    %v464 = vsub.f32 1.0, %v463
    %v465 = vmul.f32 %v462, %v464
    %v466 = vadd.f32 %v462, %v465
    %vm467 = vweird.f32 %v461
    %vm468 = vweird.f32 %v462
    %vm469 = vmor %vm467, %vm468
    %v470 = vsel %vm469, %v462, %v466
    %v471 = vand.u32 2147483647, %v461
    %vm472 = vcmp.eq.f32.partialorder %v471, 8.507059e+37
    %v473 = vand.u32 %v461, 2147483648
    %v474 = vor.u32 1.1754944e-38, %v473
    %v475 = vsel %vm472, %v474, %v470
    %v476 = vmul.f32 1.0, %v475
    %v477 = vtanh.pop %v457
    %v478 = vmul.f32 %v476, %v420
    %480 = vrot.lane.b32.xlu0 %v477, 64
    %v481 = vpop.permute.xlu0 %480
    %v483 = vmul.f32 %v476, %v481
    %485 = vrot.lane.b32.xlu0 %v483, 32
    %v486 = vpop.permute.xlu0 %485
    %v488 = vadd.f32 %v478, %v486
    %v489 = vtanh.pop %v488
    %491 = vrot.lane.b32.xlu0 %v489, 64
    %v492 = vpop.permute.xlu0 %491
    %v494 = vmul.f32 %v476, %v492
    %496 = vrot.lane.b32.xlu0 %v494, 32
    %v497 = vpop.permute.xlu0 %496
    %s499 = scalar_lea.vmem [#allocation3], 32
    %500 = vst.msk [vmem:[%s499] sm:$0xff] %vm78, %v497
    %s501 = scalar_lea.vmem [#allocation2], 40
    %v502 = vld [vmem:[%s501] sm:$0xff]
    %v503 = vsel %vm78, %v497, 0
    %505 = vmatpush.msra.mxu0 0.0
    %506 = vmatpush.msra.mxu0 0.0
    %507 = vmatpush.msra.mxu0 0.0
    %508 = vmatpush.msra.mxu0 0.0
    %509 = vmatpush.msra.mxu0 0.0
    %510 = vmatpush.msra.mxu0 0.0
    %511 = vmatpush.msra.mxu0 0.0
    %512 = vmatpush.msra.mxu0 0.0
    %513 = vmatpush.msra.mxu0 0.0
    %514 = vmatpush.msra.mxu0 0.0
    %515 = vmatpush.msra.mxu0 0.0
    %516 = vmatpush.msra.mxu0 0.0
    %517 = vmatpush.msra.mxu0 %v155
    %518 = vmatpush.msra.mxu0 %v154
    %519 = vmatpush.msra.mxu0 %v153
    %520 = vmatpush.msra.mxu0 %v152
    %521 = vmatmul.f32.gmra.mxu0 %v503
    %v522 = vpop.f32.mrf.mxu0
    %v523 = vadd.f32 0.0, %v522
    %524 = vdwg.mxu0
    %v525 = vadd.f32 %v502, %v523
    %v526 = vxor.u32 %v525, 2147483648
    %v527 = vmul.f32 %v526, 1.442695
    %v528 = vpow.pop %v527
    %v529 = vadd.f32 %v528, 1.0
    %v530 = vrcp.pop %v529
    %v531 = vmul.f32 %v529, %v530
    %v532 = vsub.f32 1.0, %v531
    %v533 = vmul.f32 %v530, %v532
    %v534 = vadd.f32 %v530, %v533
    %vm535 = vweird.f32 %v529
    %vm536 = vweird.f32 %v530
    %vm537 = vmor %vm535, %vm536
    %v538 = vsel %vm537, %v530, %v534
    %v539 = vand.u32 2147483647, %v529
    %vm540 = vcmp.eq.f32.partialorder %v539, 8.507059e+37
    %v541 = vand.u32 %v529, 2147483648
    %v542 = vor.u32 1.1754944e-38, %v541
    %v543 = vsel %vm540, %v542, %v538
    %v544 = vmul.f32 1.0, %v543
    %v545 = vtanh.pop %v525
    %v546 = vmul.f32 %v544, %v488
    %548 = vrot.lane.b32.xlu0 %v545, 64
    %v549 = vpop.permute.xlu0 %548
    %v551 = vmul.f32 %v544, %v549
    %553 = vrot.lane.b32.xlu0 %v551, 32
    %v554 = vpop.permute.xlu0 %553
    %v556 = vadd.f32 %v546, %v554
    %v557 = vtanh.pop %v556
    %559 = vrot.lane.b32.xlu0 %v557, 64
    %v560 = vpop.permute.xlu0 %559
    %v562 = vmul.f32 %v544, %v560
    %564 = vrot.lane.b32.xlu0 %v562, 32
    %v565 = vpop.permute.xlu0 %564
    %s567 = scalar_lea.vmem [#allocation3], 40
    %568 = vst.msk [vmem:[%s567] sm:$0xff] %vm78, %v565
    %s569 = scalar_lea.vmem [#allocation2], 48
    %v570 = vld [vmem:[%s569] sm:$0xff]
    %v571 = vsel %vm78, %v565, 0
    %573 = vmatpush.msra.mxu0 0.0
    %574 = vmatpush.msra.mxu0 0.0
    %575 = vmatpush.msra.mxu0 0.0
    %576 = vmatpush.msra.mxu0 0.0
    %577 = vmatpush.msra.mxu0 0.0
    %578 = vmatpush.msra.mxu0 0.0
    %579 = vmatpush.msra.mxu0 0.0
    %580 = vmatpush.msra.mxu0 0.0
    %581 = vmatpush.msra.mxu0 0.0
    %582 = vmatpush.msra.mxu0 0.0
    %583 = vmatpush.msra.mxu0 0.0
    %584 = vmatpush.msra.mxu0 0.0
    %585 = vmatpush.msra.mxu0 %v155
    %586 = vmatpush.msra.mxu0 %v154
    %587 = vmatpush.msra.mxu0 %v153
    %588 = vmatpush.msra.mxu0 %v152
    %589 = vmatmul.f32.gmra.mxu0 %v571
    %v590 = vpop.f32.mrf.mxu0
    %v591 = vadd.f32 0.0, %v590
    %592 = vdwg.mxu0
    %v593 = vadd.f32 %v570, %v591
    %v594 = vxor.u32 %v593, 2147483648
    %v595 = vmul.f32 %v594, 1.442695
    %v596 = vpow.pop %v595
    %v597 = vadd.f32 %v596, 1.0
    %v598 = vrcp.pop %v597
    %v599 = vmul.f32 %v597, %v598
    %v600 = vsub.f32 1.0, %v599
    %v601 = vmul.f32 %v598, %v600
    %v602 = vadd.f32 %v598, %v601
    %vm603 = vweird.f32 %v597
    %vm604 = vweird.f32 %v598
    %vm605 = vmor %vm603, %vm604
    %v606 = vsel %vm605, %v598, %v602
    %v607 = vand.u32 2147483647, %v597
    %vm608 = vcmp.eq.f32.partialorder %v607, 8.507059e+37
    %v609 = vand.u32 %v597, 2147483648
    %v610 = vor.u32 1.1754944e-38, %v609
    %v611 = vsel %vm608, %v610, %v606
    %v612 = vmul.f32 1.0, %v611
    %v613 = vtanh.pop %v593
    %v614 = vmul.f32 %v612, %v556
    %616 = vrot.lane.b32.xlu0 %v613, 64
    %v617 = vpop.permute.xlu0 %616
    %v619 = vmul.f32 %v612, %v617
    %621 = vrot.lane.b32.xlu0 %v619, 32
    %v622 = vpop.permute.xlu0 %621
    %v624 = vadd.f32 %v614, %v622
    %v625 = vtanh.pop %v624
    %627 = vrot.lane.b32.xlu0 %v625, 64
    %v628 = vpop.permute.xlu0 %627
    %v630 = vmul.f32 %v612, %v628
    %632 = vrot.lane.b32.xlu0 %v630, 32
    %v633 = vpop.permute.xlu0 %632
    %s635 = scalar_lea.vmem [#allocation3], 48
    %636 = vst.msk [vmem:[%s635] sm:$0xff] %vm78, %v633
    %s637 = scalar_lea.vmem [#allocation2], 56
    %v638 = vld [vmem:[%s637] sm:$0xff]
    %v639 = vsel %vm78, %v633, 0
    %641 = vmatpush.msra.mxu0 0.0
    %642 = vmatpush.msra.mxu0 0.0
    %643 = vmatpush.msra.mxu0 0.0
    %644 = vmatpush.msra.mxu0 0.0
    %645 = vmatpush.msra.mxu0 0.0
    %646 = vmatpush.msra.mxu0 0.0
    %647 = vmatpush.msra.mxu0 0.0
    %648 = vmatpush.msra.mxu0 0.0
    %649 = vmatpush.msra.mxu0 0.0
    %650 = vmatpush.msra.mxu0 0.0
    %651 = vmatpush.msra.mxu0 0.0
    %652 = vmatpush.msra.mxu0 0.0
    %653 = vmatpush.msra.mxu0 %v155
    %654 = vmatpush.msra.mxu0 %v154
    %655 = vmatpush.msra.mxu0 %v153
    %656 = vmatpush.msra.mxu0 %v152
    %657 = vmatmul.f32.gmra.mxu0 %v639
    %v658 = vpop.f32.mrf.mxu0
    %v659 = vadd.f32 0.0, %v658
    %660 = vdwg.mxu0
    %v661 = vadd.f32 %v638, %v659
    %v662 = vxor.u32 %v661, 2147483648
    %v663 = vmul.f32 %v662, 1.442695
    %v664 = vpow.pop %v663
    %v665 = vadd.f32 %v664, 1.0
    %v666 = vrcp.pop %v665
    %v667 = vmul.f32 %v665, %v666
    %v668 = vsub.f32 1.0, %v667
    %v669 = vmul.f32 %v666, %v668
    %v670 = vadd.f32 %v666, %v669
    %vm671 = vweird.f32 %v665
    %vm672 = vweird.f32 %v666
    %vm673 = vmor %vm671, %vm672
    %v674 = vsel %vm673, %v666, %v670
    %v675 = vand.u32 2147483647, %v665
    %vm676 = vcmp.eq.f32.partialorder %v675, 8.507059e+37
    %v677 = vand.u32 %v665, 2147483648
    %v678 = vor.u32 1.1754944e-38, %v677
    %v679 = vsel %vm676, %v678, %v674
    %v680 = vmul.f32 1.0, %v679
    %v681 = vtanh.pop %v661
    %v682 = vmul.f32 %v680, %v624
    %684 = vrot.lane.b32.xlu0 %v681, 64
    %v685 = vpop.permute.xlu0 %684
    %v687 = vmul.f32 %v680, %v685
    %689 = vrot.lane.b32.xlu0 %v687, 32
    %v690 = vpop.permute.xlu0 %689
    %v692 = vadd.f32 %v682, %v690
    %v693 = vtanh.pop %v692
    %695 = vrot.lane.b32.xlu0 %v693, 64
    %v696 = vpop.permute.xlu0 %695
    %v698 = vmul.f32 %v680, %v696
    %700 = vrot.lane.b32.xlu0 %v698, 32
    %v701 = vpop.permute.xlu0 %700
    %s703 = scalar_lea.vmem [#allocation3], 56
    %704 = vst.msk [vmem:[%s703] sm:$0xff] %vm78, %v701
    %705 = vst.msk [vmem:[#allocation10] sm:$0xff] %vm78, %v701
    %707 = vrot.lane.b32.xlu0 %v692, 96
    %v708 = vpop.permute.xlu0 %707
    %710 = vst.msk [vmem:[#allocation12] sm:$0xff] %vm78, %v708
    %v711 = vld [vmem:[#allocation3] sm:$0xff]
    %v712 = vld [vmem:[#allocation3 + $0x8] sm:$0xff]
    %v713 = vld [vmem:[#allocation3 + $0x10] sm:$0xff]
    %v714 = vld [vmem:[#allocation3 + $0x18] sm:$0xff]
    %v715 = vld [vmem:[#allocation3 + $0x20] sm:$0xff]
    %v716 = vld [vmem:[#allocation3 + $0x28] sm:$0xff]
    %v717 = vld [vmem:[#allocation3 + $0x30] sm:$0xff]
    %v718 = vld [vmem:[#allocation3 + $0x38] sm:$0xff]
    %v719 = vld [vmem:[%s6] sm:$0xff]
    %v720 = vld [vmem:[%s6 + $0x8] sm:$0xff]
    %v721 = vld [vmem:[%s6 + $0x10] sm:$0xff]
    %v722 = vld [vmem:[%s6 + $0x18] sm:$0xff]
    %v723 = vld [vmem:[%s7] sm:$0x1]
    %v725 = vperm.slane %v723, 0
    %v728 = vsel %vm78, %v711, 0
    %v731 = vsel %vm78, %v712, 0
    %v734 = vsel %vm78, %v713, 0
    %v737 = vsel %vm78, %v714, 0
    %v740 = vsel %vm78, %v715, 0
    %v743 = vsel %vm78, %v716, 0
    %v746 = vsel %vm78, %v717, 0
    %v749 = vsel %vm78, %v718, 0
    %751 = vmatpush.msra.mxu0 0.0
    %752 = vmatpush.msra.mxu0 0.0
    %753 = vmatpush.msra.mxu0 0.0
    %754 = vmatpush.msra.mxu0 0.0
    %755 = vmatpush.msra.mxu0 0.0
    %756 = vmatpush.msra.mxu0 0.0
    %757 = vmatpush.msra.mxu0 0.0
    %758 = vmatpush.msra.mxu0 0.0
    %759 = vmatpush.msra.mxu0 0.0
    %760 = vmatpush.msra.mxu0 0.0
    %761 = vmatpush.msra.mxu0 0.0
    %762 = vmatpush.msra.mxu0 0.0
    %763 = vmatpush.msra.mxu0 %v722
    %764 = vmatpush.msra.mxu0 %v721
    %765 = vmatpush.msra.mxu0 %v720
    %766 = vmatpush.msra.mxu0 %v719
    %767 = vmatmul.f32.gmra.mxu0 %v728
    %v768 = vpop.f32.mrf.mxu0
    %v769 = vadd.f32 %v725, %v768
    %770 = vmatmul.f32.gmra.mxu0 %v731
    %v771 = vpop.f32.mrf.mxu0
    %v772 = vadd.f32 %v725, %v771
    %773 = vmatmul.f32.gmra.mxu0 %v734
    %v774 = vpop.f32.mrf.mxu0
    %v775 = vadd.f32 %v725, %v774
    %776 = vmatmul.f32.gmra.mxu0 %v737
    %v777 = vpop.f32.mrf.mxu0
    %v778 = vadd.f32 %v725, %v777
    %779 = vmatmul.f32.gmra.mxu0 %v740
    %v780 = vpop.f32.mrf.mxu0
    %v781 = vadd.f32 %v725, %v780
    %782 = vmatmul.f32.gmra.mxu0 %v743
    %v783 = vpop.f32.mrf.mxu0
    %v784 = vadd.f32 %v725, %v783
    %785 = vmatmul.f32.gmra.mxu0 %v746
    %v786 = vpop.f32.mrf.mxu0
    %v787 = vadd.f32 %v725, %v786
    %788 = vmatmul.f32.gmra.mxu0 %v749
    %v789 = vpop.f32.mrf.mxu0
    %v790 = vadd.f32 %v725, %v789
    %791 = vdwg.mxu0
    %792 = vst [vmem:[#allocation9] sm:$0xff] %v769
    %793 = vst [vmem:[#allocation9 + $0x8] sm:$0xff] %v772
    %794 = vst [vmem:[#allocation9 + $0x10] sm:$0xff] %v775
    %795 = vst [vmem:[#allocation9 + $0x18] sm:$0xff] %v778
    %796 = vst [vmem:[#allocation9 + $0x20] sm:$0xff] %v781
    %797 = vst [vmem:[#allocation9 + $0x28] sm:$0xff] %v784
    %798 = vst [vmem:[#allocation9 + $0x30] sm:$0xff] %v787
    %799 = vst [vmem:[#allocation9 + $0x38] sm:$0xff] %v790
    // Predicated region
    $region42: #{tpu_custom_call.1} parent=1 // pred_check
      _
    $region43: #{tpu_custom_call.1} parent=1 // pred_check_branch
      %801 = sbr.rel (0) target = $region45
    $region44: #{tpu_custom_call.1} parent=1 // pred_region
      %803 = vsyncadd [#allocation6], 0
      %s804 = sshll.u32 [#allocation9], 4
      %s805 = int_to_ptr.vmem [resolvable:$true] %s804
      %s806 = sshll.u32 %s8, 4
      %s807 = int_to_ptr.hbm [resolvable:$true] %s806
      %812 = dma.vmem_to_hbm [thread:$0]  %s805, 1024, %s807, [#allocation6], 128, 128, 8
    $region45: #{tpu_custom_call.1} parent=1 // pred_fallthru
      _
    // Predicated region
    $region46: #{tpu_custom_call.1} parent=1 // pred_check
      _
    $region47: #{tpu_custom_call.1} parent=1 // pred_check_branch
      %814 = sbr.rel (0) target = $region49
    $region48: #{tpu_custom_call.1} parent=1 // pred_region
      %816 = vsyncadd [#allocation11], 0
      %s818 = sshll.u32 [#allocation10], 4
      %s819 = int_to_ptr.vmem [resolvable:$true] %s818
      %s820 = sshll.u32 %s9, 4
      %s821 = int_to_ptr.hbm [resolvable:$true] %s820
      %823 = dma.vmem_to_hbm [thread:$0]  %s819, 128, %s821, [#allocation11]
    $region49: #{tpu_custom_call.1} parent=1 // pred_fallthru
      _
    // Predicated region
    $region50: #{tpu_custom_call.1} parent=1 // pred_check
      _
    $region51: #{tpu_custom_call.1} parent=1 // pred_check_branch
      %825 = sbr.rel (0) target = $region53
    $region52: #{tpu_custom_call.1} parent=1 // pred_region
      %827 = vsyncadd [#allocation11], 0
      %s829 = sshll.u32 [#allocation12], 4
      %s830 = int_to_ptr.vmem [resolvable:$true] %s829
      %s831 = sshll.u32 %s10, 4
      %s832 = int_to_ptr.hbm [resolvable:$true] %s831
      %834 = dma.vmem_to_hbm [thread:$0]  %s830, 128, %s832, [#allocation11]
    $region53: #{tpu_custom_call.1} parent=1 // pred_fallthru
      _
    // Predicated region
    $region54: #{tpu_custom_call.1} parent=1 // pred_check
      _
    $region55: #{tpu_custom_call.1} parent=1 // pred_check_branch
      %836 = sbr.rel (0) target = $region57
    $region56: #{tpu_custom_call.1} parent=1 // pred_region
      %838 = dma.done [#allocation6], 1024
    $region57: #{tpu_custom_call.1} parent=1 // pred_fallthru
      _
    // Predicated region
    $region58: #{tpu_custom_call.1} parent=1 // pred_check
      _
    $region59: #{tpu_custom_call.1} parent=1 // pred_check_branch
      %840 = sbr.rel (0) target = $region61
    $region60: #{tpu_custom_call.1} parent=1 // pred_region
      %842 = dma.done [#allocation11], 128
    $region61: #{tpu_custom_call.1} parent=1 // pred_fallthru
      _
    // Predicated region
    $region62: #{tpu_custom_call.1} parent=1 // pred_check
      _
    $region63: #{tpu_custom_call.1} parent=1 // pred_check_branch
      %844 = sbr.rel (0) target = $region65
    $region64: #{tpu_custom_call.1} parent=1 // pred_region
      %846 = dma.done [#allocation11], 128
    $region65: #{tpu_custom_call.1} parent=1 // pred_fallthru
      _
    %847 = vsyncpa [#allocation5], 1
    %848 = vsyncpa [#allocation8], 1
    %849 = vsyncpa [#allocation6], 1
    %850 = vsyncpa [#allocation11], 1

</llo_original>
